<compile_context>
chip_gen: v7x
topology: tpu7x:2x2x1
jax: 0.10.0
libtpu: 0.0.40
codegen_flags: <defaults>
</compile_context>

<pallas_src>
import functools

import jax
import jax.numpy as jnp
from jax.experimental import pallas as pl
from jax.experimental.pallas import tpu as pltpu


def _mlp_kernel(x_ref, w13_ref, w2_ref, o_ref, acc_ref, *, ti):
    k = pl.program_id(1)

    @pl.when(k == 0)
    def _():
        acc_ref[...] = jnp.zeros_like(acc_ref)

    x = x_ref[...]
    # Fused W1|W3 slab: one DMA stream, one long MXU pass, f32 accumulation.
    h13 = jnp.dot(x, w13_ref[...], preferred_element_type=jnp.float32)  # (tb, 2*ti)
    h1 = h13[:, :ti]
    h3 = h13[:, ti:]
    gated = (h1 * jax.nn.sigmoid(h1)) * h3  # SiLU gate in f32

    # Partial contribution of this I-slab, accumulated in f32. Cast the LHS to
    # the *weight* dtype so bf16 weights always hit the fast bf16 MXU path.
    acc_ref[...] += jnp.dot(gated.astype(w2_ref.dtype), w2_ref[...],
                            preferred_element_type=jnp.float32)          # (tb, H)

    @pl.when(k == pl.num_programs(1) - 1)
    def _():
        o_ref[...] = acc_ref[...].astype(o_ref.dtype)


def _pick_tile(total, preferred, granule=128):
    """Largest multiple-of-`granule` divisor of `total` <= preferred, else full."""
    if total <= preferred:
        return total
    t = (preferred // granule) * granule
    while t >= granule:
        if total % t == 0:
            return t
        t -= granule
    return total


def _tpu_vmem_and_cores():
    """Per-TensorCore VMEM capacity and TensorCores/chip, with safe fallbacks."""
    vmem_cap = 64 * 1024 * 1024   # conservative default (v7x-like)
    num_cores = 2
    try:
        info = pltpu.get_tpu_info()
        cap = getattr(info, "vmem_capacity_bytes", None)
        if cap:
            vmem_cap = int(cap)
        cores = (getattr(info, "num_cores", None)
                 or getattr(info, "cores_per_chip", None)
                 or getattr(info, "tensorcores_per_chip", None)
                 or getattr(info, "num_tensorcores", None))
        if cores:
            num_cores = int(cores)
        else:
            # 64 MiB/TC parts (v7x) have 2 TCs/chip; 128 MiB parts have 1.
            num_cores = 2 if vmem_cap <= 64 * 1024 * 1024 else 1
    except Exception:
        pass
    return vmem_cap, num_cores


def _select_tiles(B, H, I, act_bytes, w_bytes, vmem_budget, num_cores):
    big_vmem = vmem_budget >= 96 * 1024 * 1024      # v5e / v6e (128 MiB VMEM)
    tb_pref = 1024 if big_vmem else 512             # arithmetic intensity ~ tb
    ti_pref = 1024 if big_vmem else 512

    # Keep >= 2 programs on the "parallel" batch axis when the chip has
    # multiple TensorCores (otherwise one v7x core idles).
    if num_cores >= 2 and B >= 2 * 128:
        tb_pref = min(tb_pref, max(128, B // num_cores))

    tb = _pick_tile(B, tb_pref)
    ti = _pick_tile(I, ti_pref)

    def est(tb_, ti_):
        return (2 * tb_ * H * act_bytes            # x tile (upper bound)
                + 2 * H * (2 * ti_) * w_bytes      # fused w1|w3 slab, 2x buffered
                + 2 * ti_ * H * w_bytes            # w2 slab, 2x buffered
                + 2 * tb_ * H * act_bytes          # output tile
                + tb_ * H * 4)                     # f32 accumulator scratch

    # Shrink ti first (keeps arithmetic intensity), then tb, until it fits.
    while est(tb, ti) > vmem_budget:
        if ti > 128:
            new_ti = _pick_tile(I, max(128, ti // 2))
            if new_ti < ti:
                ti = new_ti
                continue
        if tb > 8:
            new_tb = _pick_tile(B, max(8, tb // 2))
            if new_tb < tb:
                tb = new_tb
                continue
        break
    return tb, ti


def mlp_pallas(x, w1, w3, w2, *, batch_tile=None, intermediate_tile=None,
               vmem_limit_bytes=None):
    """LLaMA MLP forward. For peak TPU perf pass bf16 x and bf16 weights."""
    B, H = x.shape
    Hw, I = w1.shape
    assert Hw == H and w3.shape == (H, I) and w2.shape == (I, H)

    act_bytes = jnp.dtype(x.dtype).itemsize
    w_bytes = jnp.dtype(w1.dtype).itemsize

    vmem_cap, num_cores = _tpu_vmem_and_cores()
    # ~12 MiB headroom for Mosaic internal scratch (52 MiB usable on v7x,
    # ~116 MiB on v5e/v6e).
    vmem_budget = max(32 * 1024 * 1024, vmem_cap - 12 * 1024 * 1024)
    if vmem_limit_bytes is None:
        vmem_limit_bytes = int(vmem_budget)

    tb_auto, ti_auto = _select_tiles(B, H, I, act_bytes, w_bytes,
                                     vmem_budget, num_cores)
    tb = tb_auto if batch_tile is None else batch_tile
    ti = ti_auto if intermediate_tile is None else intermediate_tile
    assert B % tb == 0 and I % ti == 0
    nk = I // ti

    # Tile-interleaved fusion of W1 and W3: column block k (width 2*ti) of w13
    # is [w1[:, k*ti:(k+1)*ti] | w3[:, k*ti:(k+1)*ti]].
    # NOTE: in production pack once at weight-load time, not per call.
    w13 = jnp.stack([w1.reshape(H, nk, ti), w3.reshape(H, nk, ti)],
                    axis=2).reshape(H, 2 * I)

    num_batch_tiles = B // tb
    cost = pl.CostEstimate(
        flops=6 * B * H * I,                                   # 3 matmuls
        transcendentals=B * I,                                 # sigmoid
        bytes_accessed=(x.size + B * H) * act_bytes
                       + num_batch_tiles * (w13.size + w2.size) * w_bytes,
    )

    return pl.pallas_call(
        functools.partial(_mlp_kernel, ti=ti),
        out_shape=jax.ShapeDtypeStruct((B, H), x.dtype),
        grid_spec=pltpu.PrefetchScalarGridSpec(
            num_scalar_prefetch=0,
            grid=(B // tb, I // ti),
            in_specs=[
                pl.BlockSpec((tb, H), lambda i, k: (i, 0)),       # x: invariant along k
                pl.BlockSpec((H, 2 * ti), lambda i, k: (0, k)),   # fused w1|w3 slab
                pl.BlockSpec((ti, H), lambda i, k: (k, 0)),       # w2 row slab
            ],
            out_specs=pl.BlockSpec((tb, H), lambda i, k: (i, 0)),  # resident across k
            scratch_shapes=[pltpu.VMEM((tb, H), jnp.float32)],
        ),
        compiler_params=pltpu.CompilerParams(
            dimension_semantics=("parallel", "arbitrary"),
            vmem_limit_bytes=int(vmem_limit_bytes),
        ),
        cost_estimate=cost,
    )(x, w13, w2)


def init_linear_weight(key, in_features, out_features, dtype=jnp.float32):
    # Matches nn.Linear default init: U(-1/sqrt(fan_in), 1/sqrt(fan_in)).
    bound = 1.0 / (in_features ** 0.5)
    # Stored transposed: (in_features, out_features) so the kernel does x @ W.
    return jax.random.uniform(key, (in_features, out_features),
                              dtype=dtype, minval=-bound, maxval=bound)


def reference_mlp(x, w1, w3, w2):
    h1 = x @ w1
    h3 = x @ w3
    return (jax.nn.silu(h1) * h3) @ w2


if __name__ == "__main__":
    # Test 1: small shapes consistent with the module, f32 exactness.
    batch, hidden_dim, intermediate_size = 8, 32, 64
    key = jax.random.PRNGKey(0)
    kx, k1, k3, k2 = jax.random.split(key, 4)

    x = jax.random.normal(kx, (batch, hidden_dim), dtype=jnp.float32)
    w1 = init_linear_weight(k1, hidden_dim, intermediate_size)
    w3 = init_linear_weight(k3, hidden_dim, intermediate_size)
    w2 = init_linear_weight(k2, intermediate_size, hidden_dim)

    out = jax.block_until_ready(mlp_pallas(x, w1, w3, w2))
    ref = reference_mlp(x, w1, w3, w2)
    assert out.shape == (batch, hidden_dim)
    assert jnp.allclose(out, ref, atol=1e-5, rtol=1e-5), "mismatch vs reference"

    # Test 2: exercise the streamed intermediate-dim reduction (2 k-steps), f32.
    B2, H2, I2 = 16, 128, 256
    kx2, ka, kb, kc = jax.random.split(jax.random.PRNGKey(1), 4)
    x2 = jax.random.normal(kx2, (B2, H2), dtype=jnp.float32)
    wa = init_linear_weight(ka, H2, I2)
    wb = init_linear_weight(kb, H2, I2)
    wc = init_linear_weight(kc, I2, H2)
    out2 = jax.block_until_ready(mlp_pallas(x2, wa, wb, wc, intermediate_tile=128))
    ref2 = reference_mlp(x2, wa, wb, wc)
    assert jnp.allclose(out2, ref2, atol=1e-4, rtol=1e-4), "mismatch (tiled reduction)"

    # Test 3: bf16 path (the one used for real perf) with the tiled reduction.
    x3 = x2.astype(jnp.bfloat16)
    wa3, wb3, wc3 = (w.astype(jnp.bfloat16) for w in (wa, wb, wc))
    out3 = jax.block_until_ready(
        mlp_pallas(x3, wa3, wb3, wc3, intermediate_tile=128))
    ref3 = reference_mlp(x3.astype(jnp.float32), wa3.astype(jnp.float32),
                         wb3.astype(jnp.float32), wc3.astype(jnp.float32))
    assert out3.dtype == jnp.bfloat16
    assert jnp.allclose(out3.astype(jnp.float32), ref3, atol=2e-2, rtol=2e-2), \
        "mismatch (bf16 path)"

    print("KERNEL_OK")
</pallas_src>

<mosaic_0001>
module attributes {stable_mosaic.version = 11 : i64} {
  func.func @_mlp_kernel(%arg0: i32, %arg1: i32, %arg2: memref<8x32xf32, #tpu.memory_space<vmem>>, %arg3: memref<32x128xf32, #tpu.memory_space<vmem>>, %arg4: memref<64x32xf32, #tpu.memory_space<vmem>>, %arg5: memref<8x32xf32, #tpu.memory_space<vmem>>, %arg6: memref<8x32xf32, #tpu.memory_space<vmem>>) attributes {dimension_semantics = [#tpu.dimension_semantics<parallel>, #tpu.dimension_semantics<arbitrary>], iteration_bounds = array<i64: 1, 1>, scalar_prefetch = 0 : i64, scratch_operands = 1 : i64, tpu.core_type = #tpu.core_type<tc>, window_params = [{transform_indices = @transform_0, window_bounds = array<i64: 8, 32>}, {transform_indices = @transform_1, window_bounds = array<i64: 32, 128>}, {transform_indices = @transform_2, window_bounds = array<i64: 64, 32>}, {transform_indices = @transform_3, window_bounds = array<i64: 8, 32>}]} {
    %c0_i32 = arith.constant 0 : i32
    %0 = arith.cmpi eq, %arg1, %c0_i32 : i32
    %1 = arith.extui %0 : i1 to i32
    %c0_i32_0 = arith.constant 0 : i32
    %2 = arith.cmpi ne, %1, %c0_i32_0 : i32
    scf.if %2 {
      %cst_14 = arith.constant 0.000000e+00 : f32
      %23 = vector.broadcast %cst_14 : f32 to vector<8x32xf32>
      %c0_15 = arith.constant 0 : index
      %c0_16 = arith.constant 0 : index
      %24 = vector.load %arg6[%c0_15, %c0_16] : memref<8x32xf32, #tpu.memory_space<vmem>>, vector<8x32xf32>
      tpu.vector_store %arg6[%c0_15, %c0_16], %23 {strides = array<i32>} : memref<8x32xf32, #tpu.memory_space<vmem>>, vector<8x32xf32>,
    } else {
    }
    %c0 = arith.constant 0 : index
    %c0_1 = arith.constant 0 : index
    %3 = vector.load %arg2[%c0, %c0_1] : memref<8x32xf32, #tpu.memory_space<vmem>>, vector<8x32xf32>
    %c0_2 = arith.constant 0 : index
    %c0_3 = arith.constant 0 : index
    %4 = vector.load %arg3[%c0_2, %c0_3] : memref<32x128xf32, #tpu.memory_space<vmem>>, vector<32x128xf32>
    %cst = arith.constant dense<0.000000e+00> : vector<8x128xf32>
    %5 = tpu.matmul %3, %4, %cst {dimension_numbers = #tpu.dot_dimension_numbers<[1], [0], [0], [1], [0, 0, 1, 1], [], []>} : vector<8x32xf32>, vector<32x128xf32>, vector<8x128xf32> -> vector<8x128xf32>
    %6 = vector.extract_strided_slice %5 {offsets = [0, 0], sizes = [8, 64], strides = [1, 1]} : vector<8x128xf32> to vector<8x64xf32>
    %7 = vector.extract_strided_slice %5 {offsets = [0, 64], sizes = [8, 64], strides = [1, 1]} : vector<8x128xf32> to vector<8x64xf32>
    %8 = arith.negf %6 : vector<8x64xf32>
    %9 = math.exp %8 : vector<8x64xf32>
    %cst_4 = arith.constant 1.000000e+00 : f32
    %10 = vector.broadcast %cst_4 : f32 to vector<8x64xf32>
    %11 = arith.addf %10, %9 : vector<8x64xf32>
    %12 = arith.divf %10, %11 : vector<8x64xf32>
    %13 = arith.mulf %6, %12 : vector<8x64xf32>
    %14 = arith.mulf %13, %7 : vector<8x64xf32>
    %c0_5 = arith.constant 0 : index
    %c0_6 = arith.constant 0 : index
    %15 = vector.load %arg6[%c0_5, %c0_6] : memref<8x32xf32, #tpu.memory_space<vmem>>, vector<8x32xf32>
    %c0_7 = arith.constant 0 : index
    %c0_8 = arith.constant 0 : index
    %16 = vector.load %arg4[%c0_7, %c0_8] : memref<64x32xf32, #tpu.memory_space<vmem>>, vector<64x32xf32>
    %cst_9 = arith.constant dense<0.000000e+00> : vector<8x32xf32>
    %17 = tpu.matmul %14, %16, %cst_9 {dimension_numbers = #tpu.dot_dimension_numbers<[1], [0], [0], [1], [0, 0, 1, 1], [], []>} : vector<8x64xf32>, vector<64x32xf32>, vector<8x32xf32> -> vector<8x32xf32>
    %18 = arith.addf %15, %17 : vector<8x32xf32>
    %c0_10 = arith.constant 0 : index
    %c0_11 = arith.constant 0 : index
    %19 = vector.load %arg6[%c0_10, %c0_11] : memref<8x32xf32, #tpu.memory_space<vmem>>, vector<8x32xf32>
    tpu.vector_store %arg6[%c0_10, %c0_11], %18 {strides = array<i32>} : memref<8x32xf32, #tpu.memory_space<vmem>>, vector<8x32xf32>,
    %c0_i32_12 = arith.constant 0 : i32
    %20 = arith.cmpi eq, %arg1, %c0_i32_12 : i32
    %21 = arith.extui %20 : i1 to i32
    %c0_i32_13 = arith.constant 0 : i32
    %22 = arith.cmpi ne, %21, %c0_i32_13 : i32
    scf.if %22 {
      %c0_14 = arith.constant 0 : index
      %c0_15 = arith.constant 0 : index
      %23 = vector.load %arg6[%c0_14, %c0_15] : memref<8x32xf32, #tpu.memory_space<vmem>>, vector<8x32xf32>
      %c0_16 = arith.constant 0 : index
      %c0_17 = arith.constant 0 : index
      %24 = vector.load %arg5[%c0_16, %c0_17] : memref<8x32xf32, #tpu.memory_space<vmem>>, vector<8x32xf32>
      tpu.vector_store %arg5[%c0_16, %c0_17], %23 {strides = array<i32>} : memref<8x32xf32, #tpu.memory_space<vmem>>, vector<8x32xf32>,
    } else {
    }
    return
  }
  func.func @transform_0(%arg0: i32, %arg1: i32) -> (i32, i32) {
    %c0_i32 = arith.constant 0 : i32
    %c0_i32_0 = arith.constant 0 : i32
    return %arg0, %c0_i32 : i32, i32
  }
  func.func @transform_1(%arg0: i32, %arg1: i32) -> (i32, i32) {
    %c0_i32 = arith.constant 0 : i32
    %c0_i32_0 = arith.constant 0 : i32
    return %c0_i32, %arg1 : i32, i32
  }
  func.func @transform_2(%arg0: i32, %arg1: i32) -> (i32, i32) {
    %c0_i32 = arith.constant 0 : i32
    %c0_i32_0 = arith.constant 0 : i32
    return %arg1, %c0_i32 : i32, i32
  }
  func.func @transform_3(%arg0: i32, %arg1: i32) -> (i32, i32) {
    %c0_i32 = arith.constant 0 : i32
    %c0_i32_0 = arith.constant 0 : i32
    return %arg0, %c0_i32 : i32, i32
  }
}

</mosaic_0001>

<llo_original>
// kernel: tpu_custom_call.1
$region0: #{tpu_custom_call.1}
  #allocation0 [shape = 'u32[]', space=smem, size = 0x4, offset = 0x4, fixed_abs, tag = 'smem constant byte address 0x4 - core index']
  #allocation1 [shape = 'u32[144,128]{1,0:T(1,128)}', space=vmem, size = 0x12000, scoped, tag = 'internal scratch']
  #allocation2 [shape = 'f32[8,32]{1,0:T(8,128)}', space=vmem, size = 0x1000, scoped, tag = 'scratch operand']
  %s0 = inlined_call_operand.vmem [shape: f32[8,32], index: 0, kind: input, shape index: {}]
  %s1 = inlined_call_operand.vmem [shape: f32[32,128], index: 1, kind: input, shape index: {}]
  %s2 = inlined_call_operand.vmem [shape: f32[64,32], index: 2, kind: input, shape index: {}]
  %s3 = inlined_call_operand.hbm [shape: f32[8,32], index: 3, kind: output, shape index: {}]
  %s4 = sld [smem:[#allocation0]]
  $region30: #{tpu_custom_call.1} parent=0
    _
  %s6 = ssub.s32 1, %s4
  %s7 = scalar_select 0, %s6, %s4
  $region1: #{tpu_custom_call.1} parent=0
    #allocation3 [shape = 'u8[4096]{0}', space=vmem, size = 0x1000, scoped, tag = 'output window, operand 0, single buffered']
    #allocation4 [shape = 's32[1]{0}', space=sflag, size = 0x4, scoped, tag = 'scoped memory for tpu_custom_call.1']
    %8 = vsyncpa [#allocation4], 0
    // Predicated region
    $region2: #{tpu_custom_call.1} parent=1 // pred_check
      _
    $region3: #{tpu_custom_call.1} parent=1 // pred_check_branch
      %10 = sbr.rel (0) target = $region5
    $region4: #{tpu_custom_call.1} parent=1 // pred_region
      _
    $region5: #{tpu_custom_call.1} parent=1 // pred_fallthru
      _
    // Predicated region
    $region6: #{tpu_custom_call.1} parent=1 // pred_check
      _
    $region7: #{tpu_custom_call.1} parent=1 // pred_check_branch
      %12 = sbr.rel (0) target = $region9
    $region8: #{tpu_custom_call.1} parent=1 // pred_region
      _
    $region9: #{tpu_custom_call.1} parent=1 // pred_fallthru
      _
    // Predicated region
    $region10: #{tpu_custom_call.1} parent=1 // pred_check
      _
    $region11: #{tpu_custom_call.1} parent=1 // pred_check_branch
      %14 = sbr.rel (0) target = $region13
    $region12: #{tpu_custom_call.1} parent=1 // pred_region
      _
    $region13: #{tpu_custom_call.1} parent=1 // pred_fallthru
      _
    %p15 = scmp.eq.s32.totalorder 0, 0
    // Predicated region
    $region14: #{tpu_custom_call.1} parent=1 // pred_check
      %p16 = pneg %p15
    $region15: #{tpu_custom_call.1} parent=1 // pred_check_branch
      %18 = sbr.rel (%p16) target = $region17
    $region16: #{tpu_custom_call.1} parent=1 // pred_region
      %vm19 = vcmask 261120
      %20 = vst.msk [vmem:[#allocation2] sm:$0xff] %vm19, 0.0
    $region17: #{tpu_custom_call.1} parent=1 // pred_fallthru
      _
    %v21 = vld [vmem:[%s0] sm:$0xff]
    %v22 = vld [vmem:[%s1] sm:$0xff]
    %v23 = vld [vmem:[%s1 + $0x8] sm:$0xff]
    %v24 = vld [vmem:[%s1 + $0x10] sm:$0xff]
    %v25 = vld [vmem:[%s1 + $0x18] sm:$0xff]
    %vm26 = vcmask 261120
    %v28 = vsel %vm26, %v21, 0
    %30 = vmatprep.subr.mxu0 0.0
    %31 = vmatpush1.msra.mxu0 %v22
    %32 = vmatprep.subr.mxu0 0.0
    %33 = vmatpush1.msra.mxu0 %v23
    %34 = vmatprep.subr.mxu0 0.0
    %35 = vmatpush1.msra.mxu0 %v24
    %36 = vmatprep.subr.mxu0 0.0
    %37 = vmatpush1.msra.mxu0 %v25
    %38 = vmatprep.subr.mxu0 0.0
    %39 = vmatpush1.msra.mxu0 0.0
    %40 = vmatprep.subr.mxu0 0.0
    %41 = vmatpush1.msra.mxu0 0.0
    %42 = vmatprep.subr.mxu0 0.0
    %43 = vmatpush1.msra.mxu0 0.0
    %44 = vmatprep.subr.mxu0 0.0
    %45 = vmatpush1.msra.mxu0 0.0
    %46 = vmatprep.subr.mxu0 0.0
    %47 = vmatpush1.msra.mxu0 0.0
    %48 = vmatprep.subr.mxu0 0.0
    %49 = vmatpush1.msra.mxu0 0.0
    %50 = vmatprep.subr.mxu0 0.0
    %51 = vmatpush1.msra.mxu0 0.0
    %52 = vmatprep.subr.mxu0 0.0
    %53 = vmatpush1.msra.mxu0 0.0
    %54 = vmatprep.subr.mxu0 0.0
    %55 = vmatpush1.msra.mxu0 0.0
    %56 = vmatprep.subr.mxu0 0.0
    %57 = vmatpush1.msra.mxu0 0.0
    %58 = vmatprep.subr.mxu0 0.0
    %59 = vmatpush1.msra.mxu0 0.0
    %60 = vmatprep.subr.mxu0 0.0
    %61 = vmatpush1.msra.mxu0 0.0
    %62 = vmatprep.subr.mxu0 0.0
    %63 = vmatpush1.msra.mxu0 0.0
    %64 = vmatprep.subr.mxu0 0.0
    %65 = vmatpush1.msra.mxu0 0.0
    %66 = vmatprep.subr.mxu0 0.0
    %67 = vmatpush1.msra.mxu0 0.0
    %68 = vmatprep.subr.mxu0 0.0
    %69 = vmatpush1.msra.mxu0 0.0
    %70 = vmatprep.subr.mxu0 0.0
    %71 = vmatpush1.msra.mxu0 0.0
    %72 = vmatprep.subr.mxu0 0.0
    %73 = vmatpush1.msra.mxu0 0.0
    %74 = vmatprep.subr.mxu0 0.0
    %75 = vmatpush1.msra.mxu0 0.0
    %76 = vmatprep.subr.mxu0 0.0
    %77 = vmatpush1.msra.mxu0 0.0
    %78 = vmatprep.subr.mxu0 0.0
    %79 = vmatpush1.msra.mxu0 0.0
    %80 = vmatprep.subr.mxu0 0.0
    %81 = vmatpush1.msra.mxu0 0.0
    %82 = vmatprep.subr.mxu0 0.0
    %83 = vmatpush1.msra.mxu0 0.0
    %84 = vmatprep.subr.mxu0 0.0
    %85 = vmatpush1.msra.mxu0 0.0
    %86 = vmatprep.subr.mxu0 0.0
    %87 = vmatpush1.msra.mxu0 0.0
    %88 = vmatprep.subr.mxu0 0.0
    %89 = vmatpush1.msra.mxu0 0.0
    %90 = vmatprep.subr.mxu0 0.0
    %91 = vmatpush1.msra.mxu0 0.0
    %92 = vmatprep.subr.mxu0 0.0
    %93 = vmatpush1.msra.mxu0 0.0
    %94 = vmatprep.mubr.f32.mxu0 0.0
    %95 = vmatmul.mubr.f32.gmra.mrb[0].mxu0 %v28
    %v96 = vpop.f32.mrb[0].mxu0
    %v97 = vadd.f32 0.0, %v96
    %v98 = vpop.f32.mrb[0].mxu0
    %99 = vdwg.mxu0
    %v100 = vxor.u32 %v97, 2147483648
    %v101 = vmul.f32 %v100, 1.442695
    %v102 = vpow.pop %v101
    %v103 = vadd.f32 %v102, 1.0
    %v104 = vrcp.pop %v103
    %v105 = vmul.f32 1.0, %v104
    %v106 = vmul.f32 %v97, %v105
    %108 = vrot.lane.b32.xlu0 %v97, 64
    %v109 = vpop.permute.xlu0 %108
    %v111 = vmul.f32 %v106, %v109
    %v112 = vld [vmem:[#allocation2] sm:$0xff]
    %v113 = vld [vmem:[%s2] sm:$0xff]
    %v114 = vld [vmem:[%s2 + $0x8] sm:$0xff]
    %v115 = vld [vmem:[%s2 + $0x10] sm:$0xff]
    %v116 = vld [vmem:[%s2 + $0x18] sm:$0xff]
    %v117 = vld [vmem:[%s2 + $0x20] sm:$0xff]
    %v118 = vld [vmem:[%s2 + $0x28] sm:$0xff]
    %v119 = vld [vmem:[%s2 + $0x30] sm:$0xff]
    %v120 = vld [vmem:[%s2 + $0x38] sm:$0xff]
    %vm121 = vcmask 523264
    %v123 = vsel %vm121, %v111, 0
    %125 = vmatprep.subr.mxu0 0.0
    %126 = vmatpush1.msra.mxu0 %v113
    %127 = vmatprep.subr.mxu0 0.0
    %128 = vmatpush1.msra.mxu0 %v114
    %129 = vmatprep.subr.mxu0 0.0
    %130 = vmatpush1.msra.mxu0 %v115
    %131 = vmatprep.subr.mxu0 0.0
    %132 = vmatpush1.msra.mxu0 %v116
    %133 = vmatprep.subr.mxu0 0.0
    %134 = vmatpush1.msra.mxu0 %v117
    %135 = vmatprep.subr.mxu0 0.0
    %136 = vmatpush1.msra.mxu0 %v118
    %137 = vmatprep.subr.mxu0 0.0
    %138 = vmatpush1.msra.mxu0 %v119
    %139 = vmatprep.subr.mxu0 0.0
    %140 = vmatpush1.msra.mxu0 %v120
    %141 = vmatprep.subr.mxu0 0.0
    %142 = vmatpush1.msra.mxu0 0.0
    %143 = vmatprep.subr.mxu0 0.0
    %144 = vmatpush1.msra.mxu0 0.0
    %145 = vmatprep.subr.mxu0 0.0
    %146 = vmatpush1.msra.mxu0 0.0
    %147 = vmatprep.subr.mxu0 0.0
    %148 = vmatpush1.msra.mxu0 0.0
    %149 = vmatprep.subr.mxu0 0.0
    %150 = vmatpush1.msra.mxu0 0.0
    %151 = vmatprep.subr.mxu0 0.0
    %152 = vmatpush1.msra.mxu0 0.0
    %153 = vmatprep.subr.mxu0 0.0
    %154 = vmatpush1.msra.mxu0 0.0
    %155 = vmatprep.subr.mxu0 0.0
    %156 = vmatpush1.msra.mxu0 0.0
    %157 = vmatprep.subr.mxu0 0.0
    %158 = vmatpush1.msra.mxu0 0.0
    %159 = vmatprep.subr.mxu0 0.0
    %160 = vmatpush1.msra.mxu0 0.0
    %161 = vmatprep.subr.mxu0 0.0
    %162 = vmatpush1.msra.mxu0 0.0
    %163 = vmatprep.subr.mxu0 0.0
    %164 = vmatpush1.msra.mxu0 0.0
    %165 = vmatprep.subr.mxu0 0.0
    %166 = vmatpush1.msra.mxu0 0.0
    %167 = vmatprep.subr.mxu0 0.0
    %168 = vmatpush1.msra.mxu0 0.0
    %169 = vmatprep.subr.mxu0 0.0
    %170 = vmatpush1.msra.mxu0 0.0
    %171 = vmatprep.subr.mxu0 0.0
    %172 = vmatpush1.msra.mxu0 0.0
    %173 = vmatprep.subr.mxu0 0.0
    %174 = vmatpush1.msra.mxu0 0.0
    %175 = vmatprep.subr.mxu0 0.0
    %176 = vmatpush1.msra.mxu0 0.0
    %177 = vmatprep.subr.mxu0 0.0
    %178 = vmatpush1.msra.mxu0 0.0
    %179 = vmatprep.subr.mxu0 0.0
    %180 = vmatpush1.msra.mxu0 0.0
    %181 = vmatprep.subr.mxu0 0.0
    %182 = vmatpush1.msra.mxu0 0.0
    %183 = vmatprep.subr.mxu0 0.0
    %184 = vmatpush1.msra.mxu0 0.0
    %185 = vmatprep.subr.mxu0 0.0
    %186 = vmatpush1.msra.mxu0 0.0
    %187 = vmatprep.subr.mxu0 0.0
    %188 = vmatpush1.msra.mxu0 0.0
    %189 = vmatprep.mubr.f32.mxu0 0.0
    %190 = vmatmul.mubr.f32.gmra.mrb[0].mxu0 %v123
    %v191 = vpop.f32.mrb[0].mxu0
    %v192 = vadd.f32 0.0, %v191
    %v193 = vpop.f32.mrb[0].mxu0
    %194 = vdwg.mxu0
    %v195 = vadd.f32 %v112, %v192
    %196 = vst.msk [vmem:[#allocation2] sm:$0xff] %vm26, %v195
    // Predicated region
    $region18: #{tpu_custom_call.1} parent=1 // pred_check
      %p197 = pneg %p15
    $region19: #{tpu_custom_call.1} parent=1 // pred_check_branch
      %199 = sbr.rel (%p197) target = $region21
    $region20: #{tpu_custom_call.1} parent=1 // pred_region
      %v200 = vld [vmem:[#allocation2] sm:$0xff]
      %201 = vst.msk [vmem:[#allocation3] sm:$0xff] %vm26, %v200
    $region21: #{tpu_custom_call.1} parent=1 // pred_fallthru
      _
    // Predicated region
    $region22: #{tpu_custom_call.1} parent=1 // pred_check
      _
    $region23: #{tpu_custom_call.1} parent=1 // pred_check_branch
      %203 = sbr.rel (0) target = $region25
    $region24: #{tpu_custom_call.1} parent=1 // pred_region
      %s205 = ssub.s32 128, 128
      %206 = vsyncadd [#allocation4], %s205
      %s208 = sshll.u32 [#allocation3], 4
      %s209 = int_to_ptr.vmem [resolvable:$true] %s208
      %211 = dma.vmem_to_hbm [thread:$0]  %s209, 128, %s3, [#allocation4]
    $region25: #{tpu_custom_call.1} parent=1 // pred_fallthru
      _
    // Predicated region
    $region26: #{tpu_custom_call.1} parent=1 // pred_check
      _
    $region27: #{tpu_custom_call.1} parent=1 // pred_check_branch
      %213 = sbr.rel (0) target = $region29
    $region28: #{tpu_custom_call.1} parent=1 // pred_region
      %214 = dma.done [#allocation4], 128
    $region29: #{tpu_custom_call.1} parent=1 // pred_fallthru
      _
    %215 = vsyncpa [#allocation4], 1

</llo_original>
